<compile_context>
chip_gen: v5e
topology: v5e:2x2
jax: 0.10.0
libtpu: 0.0.40
codegen_flags: <defaults>
</compile_context>

<pallas_src>
import jax
import jax.numpy as jnp
from jax.experimental import pallas as pl
from jax.experimental.pallas import tpu as pltpu


def _pos_enc_kernel(x_ref, pe_ref, o_ref):
    # x_ref / o_ref: (tile_rows, H) tiles; pe_ref: (tile_rows, 1) column.
    # Single broadcast add -- the only VALU work in this memory-bound kernel.
    o_ref[...] = x_ref[...] + pe_ref[...]


def positional_encoder(word_embeddings: jax.Array, max_len: int) -> jax.Array:
    """Pallas TPU implementation of PositionalEncoder.forward.

    word_embeddings: (B, S, H), with S == max_len (matches the pe buffer).
    """
    B, S, H = word_embeddings.shape
    assert S == max_len, "sequence axis must equal max_len for pe broadcast"

    total_rows = B * S
    x2d = word_embeddings.reshape(total_rows, H)
    dtype = x2d.dtype
    itemsize = dtype.itemsize

    # pe computed once outside the kernel; one value per flattened row
    # (row i of the batch-major flatten has sequence position i % S).
    pe = jnp.sin(jnp.arange(S, dtype=jnp.float32))[:, None]   # (S, 1)
    pe_rows = jnp.tile(pe, (B, 1)).astype(dtype)               # (B*S, 1)

    # Tile sizing: ~3 MiB per x/out buffer (double-buffered in+out ~= 12 MiB,
    # safe under the v5e 16 MiB scoped-VMEM default; v6e/v7x have 32 MiB).
    # Round rows to the packed-sublane multiple for the dtype so loads/stores
    # stay unmasked: f32 -> 8, bf16 -> 16, int8 -> 32.
    bytes_per_row = H * itemsize
    sublane = max(8, 32 // max(itemsize, 1))
    target_bytes = 3 * 1024 * 1024
    tile_rows = max(sublane, target_bytes // max(bytes_per_row, 1))
    tile_rows = max(sublane, (tile_rows // sublane) * sublane)
    tile_rows = min(tile_rows, total_rows)
    if tile_rows % sublane != 0:
        tile_rows = total_rows  # full extent is always a legal block dim

    grid = (pl.cdiv(total_rows, tile_rows),)

    cost = pl.CostEstimate(
        flops=total_rows * H,
        transcendentals=0,
        bytes_accessed=2 * total_rows * H * itemsize + total_rows * itemsize,
    )

    out2d = pl.pallas_call(
        _pos_enc_kernel,
        out_shape=jax.ShapeDtypeStruct((total_rows, H), dtype),
        grid=grid,
        in_specs=[
            pl.BlockSpec((tile_rows, H), lambda r: (r, 0)),
            pl.BlockSpec((tile_rows, 1), lambda r: (r, 0)),
        ],
        out_specs=pl.BlockSpec((tile_rows, H), lambda r: (r, 0)),
        compiler_params=pltpu.CompilerParams(
            dimension_semantics=("parallel",),
        ),
        cost_estimate=cost,
    )(x2d, pe_rows)

    return out2d.reshape(B, S, H)


if __name__ == "__main__":
    # Small shapes consistent with the forward: (batch, seq=max_len, hidden).
    B, S, H = 2, 8, 128
    max_len = S

    key = jax.random.PRNGKey(0)
    x = jax.random.normal(key, (B, S, H), dtype=jnp.float32)

    out = jax.block_until_ready(positional_encoder(x, max_len))

    # Reference check against plain JAX (mirrors the PyTorch forward).
    pe_ref = jnp.sin(jnp.arange(max_len, dtype=jnp.float32)[:, None])  # (S, 1)
    expected = x + pe_ref  # broadcasts to (B, S, H)
    assert out.shape == (B, S, H)
    assert jnp.allclose(out, expected, atol=1e-5, rtol=1e-5), "mismatch vs reference"

    print("KERNEL_OK")
</pallas_src>

<mosaic_0001>
module attributes {stable_mosaic.version = 11 : i64} {
  func.func @_pos_enc_kernel(%arg0: i32, %arg1: memref<16x128xf32, #tpu.memory_space<vmem>>, %arg2: memref<16x1xf32, #tpu.memory_space<vmem>>, %arg3: memref<16x128xf32, #tpu.memory_space<vmem>>) attributes {dimension_semantics = [#tpu.dimension_semantics<parallel>], iteration_bounds = array<i64: 1>, scalar_prefetch = 0 : i64, scratch_operands = 0 : i64, tpu.core_type = #tpu.core_type<tc>, window_params = [{transform_indices = @transform_0, window_bounds = array<i64: 16, 128>}, {transform_indices = @transform_1, window_bounds = array<i64: 16, 1>}, {transform_indices = @transform_2, window_bounds = array<i64: 16, 128>}]} {
    %c0 = arith.constant 0 : index
    %c0_0 = arith.constant 0 : index
    %0 = vector.load %arg1[%c0, %c0_0] : memref<16x128xf32, #tpu.memory_space<vmem>>, vector<16x128xf32>
    %c0_1 = arith.constant 0 : index
    %c0_2 = arith.constant 0 : index
    %1 = vector.load %arg2[%c0_1, %c0_2] : memref<16x1xf32, #tpu.memory_space<vmem>>, vector<16x1xf32>
    %2 = vector.broadcast %1 : vector<16x1xf32> to vector<16x128xf32>
    %3 = arith.addf %0, %2 : vector<16x128xf32>
    %c0_3 = arith.constant 0 : index
    %c0_4 = arith.constant 0 : index
    %4 = vector.load %arg3[%c0_3, %c0_4] : memref<16x128xf32, #tpu.memory_space<vmem>>, vector<16x128xf32>
    tpu.vector_store %arg3[%c0_3, %c0_4], %3 {strides = array<i32>} : memref<16x128xf32, #tpu.memory_space<vmem>>, vector<16x128xf32>,
    return
  }
  func.func @transform_0(%arg0: i32) -> (i32, i32) {
    %c0_i32 = arith.constant 0 : i32
    %c0_i32_0 = arith.constant 0 : i32
    return %arg0, %c0_i32 : i32, i32
  }
  func.func @transform_1(%arg0: i32) -> (i32, i32) {
    %c0_i32 = arith.constant 0 : i32
    %c0_i32_0 = arith.constant 0 : i32
    return %arg0, %c0_i32 : i32, i32
  }
  func.func @transform_2(%arg0: i32) -> (i32, i32) {
    %c0_i32 = arith.constant 0 : i32
    %c0_i32_0 = arith.constant 0 : i32
    return %arg0, %c0_i32 : i32, i32
  }
}

</mosaic_0001>

<llo_original>
// kernel: tpu_custom_call.1
$region0: #{tpu_custom_call.1}
  #allocation0 [shape = 'u32[]', space=smem, size = 0x4, offset = 0x4, fixed_abs, tag = 'smem constant byte address 0x4 - core index']
  #allocation1 [shape = 'u32[72,128]{1,0:T(1,128)}', space=vmem, size = 0x9000, scoped, tag = 'internal scratch']
  %s0 = inlined_call_operand.vmem [shape: f32[16,128], index: 0, kind: input, shape index: {}]
  %s1 = inlined_call_operand.vmem [shape: f32[16,1], index: 1, kind: input, shape index: {}]
  %s2 = inlined_call_operand.hbm [shape: f32[16,128], index: 2, kind: output, shape index: {}]
  %s3 = sld [smem:[#allocation0]]
  $region18: #{tpu_custom_call.1} parent=0
    _
  %s5 = ssub.s32 1, %s3
  %s6 = scalar_select 0, %s5, %s3
  $region1: #{tpu_custom_call.1} parent=0
    #allocation2 [shape = 'u8[8192]{0}', space=vmem, size = 0x2000, scoped, tag = 'output window, operand 0, single buffered']
    #allocation3 [shape = 's32[1]{0}', space=sflag, size = 0x4, scoped, tag = 'scoped memory for tpu_custom_call.1']
    %7 = vsyncpa [#allocation3], 0
    // Predicated region
    $region2: #{tpu_custom_call.1} parent=1 // pred_check
      _
    $region3: #{tpu_custom_call.1} parent=1 // pred_check_branch
      %9 = sbr.rel (0) target = $region5
    $region4: #{tpu_custom_call.1} parent=1 // pred_region
      _
    $region5: #{tpu_custom_call.1} parent=1 // pred_fallthru
      _
    // Predicated region
    $region6: #{tpu_custom_call.1} parent=1 // pred_check
      _
    $region7: #{tpu_custom_call.1} parent=1 // pred_check_branch
      %11 = sbr.rel (0) target = $region9
    $region8: #{tpu_custom_call.1} parent=1 // pred_region
      _
    $region9: #{tpu_custom_call.1} parent=1 // pred_fallthru
      _
    %v12 = vld [vmem:[%s0] sm:$0xff]
    %v13 = vld [vmem:[%s0 + $0x8] sm:$0xff]
    %v14 = vld [vmem:[%s1] sm:$0xff]
    %v15 = vld [vmem:[%s1 + $0x8] sm:$0xff]
    %17 = vset.pattern.permute.xlu0 0
    %18 = vperm.xlu0 %17, %v14
    %v19 = vpop.permute.xlu0 %18
    %22 = vset.pattern.permute.xlu0 0
    %23 = vperm.xlu0 %22, %v15
    %v24 = vpop.permute.xlu0 %23
    %v26 = vadd.f32 %v12, %v19
    %v27 = vadd.f32 %v13, %v24
    %28 = vst [vmem:[#allocation2] sm:$0xff] %v26
    %29 = vst [vmem:[#allocation2 + $0x8] sm:$0xff] %v27
    // Predicated region
    $region10: #{tpu_custom_call.1} parent=1 // pred_check
      _
    $region11: #{tpu_custom_call.1} parent=1 // pred_check_branch
      %31 = sbr.rel (0) target = $region13
    $region12: #{tpu_custom_call.1} parent=1 // pred_region
      %33 = vsyncadd [#allocation3], 0
      %s34 = sshll.u32 [#allocation2], 4
      %s35 = int_to_ptr.vmem [resolvable:$true] %s34
      %s36 = sshll.u32 %s2, 4
      %s37 = int_to_ptr.hbm [resolvable:$true] %s36
      %42 = dma.vmem_to_hbm [thread:$0]  %s35, 256, %s37, [#allocation3], 128, 128, 8
    $region13: #{tpu_custom_call.1} parent=1 // pred_fallthru
      _
    // Predicated region
    $region14: #{tpu_custom_call.1} parent=1 // pred_check
      _
    $region15: #{tpu_custom_call.1} parent=1 // pred_check_branch
      %44 = sbr.rel (0) target = $region17
    $region16: #{tpu_custom_call.1} parent=1 // pred_region
      %46 = dma.done [#allocation3], 256
    $region17: #{tpu_custom_call.1} parent=1 // pred_fallthru
      _
    %47 = vsyncpa [#allocation3], 1

</llo_original>
